<compile_context>
chip_gen: v7x
topology: tpu7x:2x2x1
jax: 0.10.0
libtpu: 0.0.40
codegen_flags: <defaults>
</compile_context>

<pallas_src>
import functools

import jax
import jax.numpy as jnp
from jax import lax
from jax.experimental import pallas as pl
from jax.experimental.pallas import tpu as pltpu


def _scale_norm_kernel(g_ref, x_ref, o_ref, *, scale, eps):
    # x_ref: (TILE_ROWS, D) tile in VMEM; g_ref: (1,) scalar gain in SMEM.
    x = x_ref[...].astype(jnp.float32)
    # sum of squares over lanes (XLU reduce), then per-row rsqrt on the EUP.
    ssq = jnp.sum(x * x, axis=-1, keepdims=True)
    # norm = sqrt(ssq) * scale ; clamp(min=eps) ; y = x / norm * g
    #   ==  x * g * rsqrt(max(ssq * scale^2, eps^2))
    inv = lax.rsqrt(jnp.maximum(ssq * (scale * scale), eps * eps))
    o_ref[...] = (x * (inv * g_ref[0])).astype(o_ref.dtype)


def _pick_tile_rows(rows, d, itemsize, tile_rows=None):
    """Largest row tile that keeps 2x(in)+2x(out) buffers under ~24 MiB."""
    sub = 8 if itemsize >= 4 else (16 if itemsize == 2 else 32)
    if tile_rows is not None:
        return int(tile_rows)
    if rows <= sub:
        # single block equal to the full row extent (satisfies the (8,128) rule
        # via the "equals full array dim" exemption).
        return rows
    budget_bytes = 24 << 20            # total for 4 double-buffered tiles
    t = budget_bytes // (4 * d * itemsize)
    t = max(sub, (t // sub) * sub)     # sublane-aligned
    t = min(t, 1024)                   # diminishing returns past ~512-1024 rows
    t = min(t, (rows // sub) * sub)    # never exceed the row count
    return max(t, sub)


def scale_norm(x, g, *, eps=1e-5, tile_rows=None):
    """ScaleNorm over the last dimension of x.

    x: (..., D) array
    g: (1,) learnable scalar gain
    tile_rows: optional override for the row tile (sweepable knob).
    """
    *lead, d = x.shape
    scale = float(d) ** (-0.5)

    x2d = x.reshape(-1, d)             # contiguous view, no HBM copy
    rows = x2d.shape[0]
    itemsize = jnp.dtype(x.dtype).itemsize
    tr = _pick_tile_rows(rows, d, itemsize, tile_rows)
    grid = (pl.cdiv(rows, tr),)        # ragged last block handled by Pallas

    kernel = functools.partial(_scale_norm_kernel, scale=scale, eps=eps)

    out2d = pl.pallas_call(
        kernel,
        out_shape=jax.ShapeDtypeStruct((rows, d), x.dtype),
        grid=grid,
        in_specs=[
            pl.BlockSpec(memory_space=pltpu.SMEM),          # g (scalar gain)
            pl.BlockSpec((tr, d), lambda i: (i, 0)),        # x row-tile
        ],
        out_specs=pl.BlockSpec((tr, d), lambda i: (i, 0)),
        compiler_params=pltpu.CompilerParams(
            dimension_semantics=("parallel",),
            vmem_limit_bytes=48 << 20,                      # safe on v5e/v6e/v7x
        ),
        cost_estimate=pl.CostEstimate(
            flops=3 * rows * d,                             # square, reduce, scale
            transcendentals=rows,                           # one rsqrt per row
            bytes_accessed=2 * rows * d * itemsize,
        ),
    )(g.astype(jnp.float32), x2d)

    return out2d.reshape(*lead, d)


def _reference(x, g, eps):
    norm = jnp.linalg.norm(x.astype(jnp.float32), axis=-1, keepdims=True)
    norm = norm * (x.shape[-1] ** -0.5)
    return (x.astype(jnp.float32) / jnp.maximum(norm, eps) * g[0]).astype(x.dtype)


if __name__ == "__main__":
    key = jax.random.PRNGKey(0)

    # Deterministic inputs consistent with the module: batch=2, seq=8, hidden=32.
    B, T, D = 2, 8, 32
    x = jax.random.normal(key, (B, T, D), dtype=jnp.float32)
    g = jnp.ones((1,), dtype=jnp.float32)   # nn.Parameter(torch.ones(1))

    out = scale_norm(x, g, eps=1e-5)
    jax.block_until_ready(out)
    assert out.shape == x.shape
    assert jnp.allclose(out, _reference(x, g, 1e-5), atol=1e-5, rtol=1e-5), \
        "mismatch vs reference (aligned shape)"

    # Ragged row count (rows=15, not a multiple of 8) exercises the masked
    # last-block path that replaced the jnp.pad/slice round-trip.
    x2 = jax.random.normal(jax.random.PRNGKey(1), (3, 5, D), dtype=jnp.float32)
    out2 = scale_norm(x2, g, eps=1e-5)
    jax.block_until_ready(out2)
    assert out2.shape == x2.shape
    assert jnp.allclose(out2, _reference(x2, g, 1e-5), atol=1e-5, rtol=1e-5), \
        "mismatch vs reference (ragged rows)"

    print("KERNEL_OK")
</pallas_src>

<mosaic_0001>
module attributes {stable_mosaic.version = 11 : i64} {
  func.func @_scale_norm_kernel(%arg0: i32, %arg1: memref<1xf32, #tpu.memory_space<smem>>, %arg2: memref<16x32xf32, #tpu.memory_space<vmem>>, %arg3: memref<16x32xf32, #tpu.memory_space<vmem>>) attributes {dimension_semantics = [#tpu.dimension_semantics<parallel>], iteration_bounds = array<i64: 1>, scalar_prefetch = 0 : i64, scratch_operands = 0 : i64, tpu.core_type = #tpu.core_type<tc>, window_params = [{transform_indices = @transform_0, window_bounds = array<i64: 1>}, {transform_indices = @transform_1, window_bounds = array<i64: 16, 32>}, {transform_indices = @transform_2, window_bounds = array<i64: 16, 32>}]} {
    %c0 = arith.constant 0 : index
    %c0_0 = arith.constant 0 : index
    %0 = vector.load %arg2[%c0, %c0_0] : memref<16x32xf32, #tpu.memory_space<vmem>>, vector<16x32xf32>
    %1 = arith.mulf %0, %0 : vector<16x32xf32>
    %cst = arith.constant dense<0.000000e+00> : vector<16xf32>
    %2 = vector.multi_reduction <add>, %1, %cst [1] : vector<16x32xf32> to vector<16xf32>
    %3 = vector.shape_cast %2 : vector<16xf32> to vector<16x1xf32>
    %cst_1 = arith.constant 3.125000e-02 : f32
    %4 = vector.broadcast %cst_1 : f32 to vector<16x1xf32>
    %5 = arith.mulf %3, %4 : vector<16x1xf32>
    %cst_2 = arith.constant 1.000000e-10 : f32
    %6 = vector.broadcast %cst_2 : f32 to vector<16x1xf32>
    %7 = arith.maximumf %5, %6 : vector<16x1xf32>
    %8 = math.rsqrt %7 : vector<16x1xf32>
    %c0_3 = arith.constant 0 : index
    %9 = memref.load %arg1[%c0_3] : memref<1xf32, #tpu.memory_space<smem>>
    %10 = vector.broadcast %9 : f32 to vector<16x1xf32>
    %11 = arith.mulf %8, %10 : vector<16x1xf32>
    %12 = vector.broadcast %11 : vector<16x1xf32> to vector<16x32xf32>
    %13 = arith.mulf %0, %12 : vector<16x32xf32>
    %c0_4 = arith.constant 0 : index
    %c0_5 = arith.constant 0 : index
    %14 = vector.load %arg3[%c0_4, %c0_5] : memref<16x32xf32, #tpu.memory_space<vmem>>, vector<16x32xf32>
    tpu.vector_store %arg3[%c0_4, %c0_5], %13 {strides = array<i32>} : memref<16x32xf32, #tpu.memory_space<vmem>>, vector<16x32xf32>,
    return
  }
  func.func @transform_0(%arg0: i32) -> i32 {
    %c0_i32 = arith.constant 0 : i32
    %c0_i32_0 = arith.constant 0 : i32
    return %c0_i32 : i32
  }
  func.func @transform_1(%arg0: i32) -> (i32, i32) {
    %c0_i32 = arith.constant 0 : i32
    %c0_i32_0 = arith.constant 0 : i32
    return %arg0, %c0_i32 : i32, i32
  }
  func.func @transform_2(%arg0: i32) -> (i32, i32) {
    %c0_i32 = arith.constant 0 : i32
    %c0_i32_0 = arith.constant 0 : i32
    return %arg0, %c0_i32 : i32, i32
  }
}

</mosaic_0001>

<llo_original>
// kernel: tpu_custom_call.1
$region0: #{tpu_custom_call.1}
  #allocation0 [shape = 'u32[]', space=smem, size = 0x4, offset = 0x4, fixed_abs, tag = 'smem constant byte address 0x4 - core index']
  #allocation1 [shape = 'u32[144,128]{1,0:T(1,128)}', space=vmem, size = 0x12000, scoped, tag = 'internal scratch']
  #allocation2 [shape = 'f32[1]{0:T(128)S(6)}', space=smem, size = 0x200, scoped, tag = 'scoped memory for tpu_custom_call.1']
  %s0 = inlined_call_operand.<no memory space> [shape: f32[1], index: 0, kind: input, shape index: {}]
  %s1 = inlined_call_operand.hbm [shape: f32[16,32], index: 1, kind: input, shape index: {}]
  %s2 = inlined_call_operand.hbm [shape: f32[16,32], index: 2, kind: output, shape index: {}]
  %s3 = sld [smem:[#allocation0]]
  $region22: #{tpu_custom_call.1} parent=0
    _
  %s5 = ssub.s32 1, %s3
  %s6 = scalar_select 0, %s5, %s3
  %7 = sst [smem:[#allocation2]] %s0
  $region1: #{tpu_custom_call.1} parent=0
    #allocation3 [shape = 'u8[8192]{0}', space=vmem, size = 0x2000, scoped, tag = 'input window, operand 1, single buffered']
    #allocation4 [shape = 's32[1]{0}', space=sflag, size = 0x4, scoped, tag = 'scoped memory for tpu_custom_call.1']
    #allocation5 [shape = 's32[1]{0}', space=sflag, size = 0x4, scoped, tag = 'scoped memory for tpu_custom_call.1']
    #allocation6 [shape = 'u8[8192]{0}', space=vmem, size = 0x2000, scoped, tag = 'output window, operand 0, single buffered']
    %8 = vsyncpa [#allocation4], 0
    %9 = vsyncpa [#allocation5], 0
    // Predicated region
    $region2: #{tpu_custom_call.1} parent=1 // pred_check
      _
    $region3: #{tpu_custom_call.1} parent=1 // pred_check_branch
      %11 = sbr.rel (0) target = $region5
    $region4: #{tpu_custom_call.1} parent=1 // pred_region
      _
    $region5: #{tpu_custom_call.1} parent=1 // pred_fallthru
      _
    // Predicated region
    $region6: #{tpu_custom_call.1} parent=1 // pred_check
      _
    $region7: #{tpu_custom_call.1} parent=1 // pred_check_branch
      %13 = sbr.rel (0) target = $region9
    $region8: #{tpu_custom_call.1} parent=1 // pred_region
      %s15 = ssub.s32 256, 256
      %16 = vsyncadd [#allocation4], %s15
      %s17 = sshll.u32 [#allocation3], 4
      %s18 = int_to_ptr.vmem [resolvable:$true] %s17
      %23 = dma.hbm_to_vmem [thread:$0]  %s1, 256, %s18, [#allocation4], 128, 128, 8
    $region9: #{tpu_custom_call.1} parent=1 // pred_fallthru
      _
    // Predicated region
    $region10: #{tpu_custom_call.1} parent=1 // pred_check
      _
    $region11: #{tpu_custom_call.1} parent=1 // pred_check_branch
      %25 = sbr.rel (0) target = $region13
    $region12: #{tpu_custom_call.1} parent=1 // pred_region
      %26 = dma.done [#allocation4], 256
    $region13: #{tpu_custom_call.1} parent=1 // pred_fallthru
      _
    %v27 = vld [vmem:[#allocation3] sm:$0xff]
    %v28 = vld [vmem:[#allocation3 + $0x8] sm:$0xff]
    %v29 = vmul.f32 %v27, %v27
    %v30 = vmul.f32 %v28, %v28
    %vm31 = vcmask 261120
    %v32 = vsel %vm31, %v29, 0.0
    %33 = vadd.xlane.f32.xlu0 %v32
    %v34 = vpop.xlane.xlu0 %33
    %v35 = vsel %vm31, %v30, 0.0
    %36 = vadd.xlane.f32.xlu0 %v35
    %v37 = vpop.xlane.xlu0 %36
    %v38 = vmul.f32 %v34, 0.03125
    %v39 = vmul.f32 %v37, 0.03125
    %v40 = vmax.f32 %v38, 1e-10
    %v41 = vmax.f32 %v39, 1e-10
    %v42 = vrsqrt.pop %v40
    %v43 = vrsqrt.pop %v41
    %s44 = sld [smem:[#allocation2]]
    %v45 = vstv %s44
    %v46 = vmul.f32 %v42, %v45
    %v47 = vmul.f32 %v43, %v45
    %v48 = vmul.f32 %v27, %v46
    %v49 = vmul.f32 %v28, %v47
    %50 = vst.msk [vmem:[#allocation6] sm:$0xff] %vm31, %v48
    %51 = vst.msk [vmem:[#allocation6 + $0x8] sm:$0xff] %vm31, %v49
    // Predicated region
    $region14: #{tpu_custom_call.1} parent=1 // pred_check
      _
    $region15: #{tpu_custom_call.1} parent=1 // pred_check_branch
      %53 = sbr.rel (0) target = $region17
    $region16: #{tpu_custom_call.1} parent=1 // pred_region
      %s55 = ssub.s32 256, 256
      %56 = vsyncadd [#allocation5], %s55
      %s57 = sshll.u32 [#allocation6], 4
      %s58 = int_to_ptr.vmem [resolvable:$true] %s57
      %63 = dma.vmem_to_hbm [thread:$0]  %s58, 256, %s2, [#allocation5], 128, 128, 8
    $region17: #{tpu_custom_call.1} parent=1 // pred_fallthru
      _
    // Predicated region
    $region18: #{tpu_custom_call.1} parent=1 // pred_check
      _
    $region19: #{tpu_custom_call.1} parent=1 // pred_check_branch
      %65 = sbr.rel (0) target = $region21
    $region20: #{tpu_custom_call.1} parent=1 // pred_region
      %66 = dma.done [#allocation5], 256
    $region21: #{tpu_custom_call.1} parent=1 // pred_fallthru
      _
    %67 = vsyncpa [#allocation4], 1
    %68 = vsyncpa [#allocation5], 1

</llo_original>
